<compile_context>
chip_gen: v7x
topology: tpu7x:2x2x1
jax: 0.10.0
libtpu: 0.0.40
codegen_flags: <defaults>
</compile_context>

<pallas_src>
import jax
import jax.numpy as jnp
from jax.experimental import pallas as pl
from jax.experimental.pallas import tpu as pltpu

N_LAYERS = 5          # input_layer + 3 hidden + output_layer
NEG_FILL = -1e30      # bias fill for padded output classes -> exp() == 0 under softmax


def _round_up(x, m):
    return ((x + m - 1) // m) * m


def mlp_kernel(x_ref, w_ref, b_ref, out_ref):
    """Fused forward for one (TM, 128) batch tile.

    x_ref  : (TM, F_PAD)        bf16 activations (zero-padded features)
    w_ref  : (5, F_PAD, F_PAD)  bf16 packed weights (zero-padded)
    b_ref  : (5, 1, F_PAD)      f32 packed biases (last layer padded with -1e30)
    out_ref: (TM, F_PAD)        f32 softmax probabilities (padded lanes ~ 0)
    """
    h_bf16 = x_ref[...]                                        # (TM, F_PAD) bf16

    # 4 x (Linear -> ReLU): bf16 MXU operands, f32 accumulate, f32 elementwise.
    for i in range(N_LAYERS - 1):
        z = jnp.dot(h_bf16, w_ref[i],
                    preferred_element_type=jnp.float32) + b_ref[i]
        h_bf16 = jnp.maximum(z, 0.0).astype(jnp.bfloat16)

    # output layer (no ReLU)
    logits = jnp.dot(h_bf16, w_ref[N_LAYERS - 1],
                     preferred_element_type=jnp.float32) + b_ref[N_LAYERS - 1]

    # numerically-stable softmax over the class (lane) axis; padded lanes have
    # bias -1e30 so exp() underflows to exactly 0 and does not touch the denom.
    m = jnp.max(logits, axis=-1, keepdims=True)
    e = jnp.exp(logits - m)
    denom = jnp.sum(e, axis=-1, keepdims=True)
    out_ref[...] = (e * pl.reciprocal(denom, approx=True)).astype(out_ref.dtype)


def pack_params(params, f_pad):
    """Pack 5 (w, b) pairs into one bf16 weight slab and one f32 bias slab."""
    ws, bs = [], []
    for li, (w, b) in enumerate(params):
        fi, fo = w.shape
        wp = jnp.zeros((f_pad, f_pad), jnp.float32).at[:fi, :fo].set(w)
        fill = 0.0 if li < len(params) - 1 else NEG_FILL
        bp = jnp.full((f_pad,), fill, jnp.float32).at[:fo].set(b.reshape(-1))
        ws.append(wp)
        bs.append(bp)
    w_packed = jnp.stack(ws).astype(jnp.bfloat16)               # (5, F_PAD, F_PAD)
    b_packed = jnp.stack(bs).reshape(len(params), 1, f_pad)     # (5, 1, F_PAD) f32
    return w_packed, b_packed


def mlp_forward(x, params):
    """params: list of 5 (w, b) with w shaped (in, out) f32, b shaped (out,) f32."""
    assert len(params) == N_LAYERS
    batch, d_in = x.shape
    n_classes = params[-1][0].shape[1]

    # pad every feature dim to a lane-dense multiple of 128 (one width fits all layers here)
    all_dims = [d_in] + [w.shape[1] for (w, _) in params]
    f_pad = _round_up(max(all_dims), 128)

    # batch tile: multiple of 8 sublanes; 256 rows once the batch is large enough
    tm = 256 if batch >= 256 else _round_up(batch, 8)
    b_pad = _round_up(batch, tm)

    w_packed, b_packed = pack_params(params, f_pad)
    x_pad = jnp.zeros((b_pad, f_pad), jnp.bfloat16).at[:batch, :d_in].set(
        x.astype(jnp.bfloat16))

    out_padded = pl.pallas_call(
        mlp_kernel,
        out_shape=jax.ShapeDtypeStruct((b_pad, f_pad), jnp.float32),
        grid_spec=pltpu.PrefetchScalarGridSpec(
            num_scalar_prefetch=0,
            grid=(b_pad // tm,),
            in_specs=[
                pl.BlockSpec((tm, f_pad), lambda i: (i, 0)),            # activations: tiled
                pl.BlockSpec((N_LAYERS, f_pad, f_pad), lambda i: (0, 0, 0)),  # weights: resident
                pl.BlockSpec((N_LAYERS, 1, f_pad), lambda i: (0, 0, 0)),      # biases: resident
            ],
            out_specs=pl.BlockSpec((tm, f_pad), lambda i: (i, 0)),
        ),
        compiler_params=pltpu.CompilerParams(
            dimension_semantics=("parallel",),   # batch axis -> both TCs on v7x
        ),
    )(x_pad, w_packed, b_packed)

    return out_padded[:batch, :n_classes]


def init_params(key, nodes, n_classes):
    """Deterministic PyTorch-Linear-style uniform init: U(-1/sqrt(fan_in), 1/sqrt(fan_in))."""
    dims = list(nodes) + [n_classes]
    params = []
    for i in range(len(dims) - 1):
        fan_in, fan_out = dims[i], dims[i + 1]
        key, kw, kb = jax.random.split(key, 3)
        bound = 1.0 / (fan_in ** 0.5)
        w = jax.random.uniform(kw, (fan_in, fan_out), jnp.float32, -bound, bound)
        b = jax.random.uniform(kb, (fan_out,), jnp.float32, -bound, bound)
        params.append((w, b))
    return params


def mlp_reference_f32(x, params):
    """Pure-f32 PyTorch-semantics reference."""
    h = x
    for i, (w, b) in enumerate(params):
        h = h @ w + b.reshape(1, -1)
        if i < len(params) - 1:
            h = jnp.maximum(h, 0.0)
    return jax.nn.softmax(h, axis=1)


def mlp_reference_bf16(x, params):
    """Reference mirroring the kernel's bf16-operand / f32-accumulate matmuls."""
    h = x.astype(jnp.bfloat16)
    z = None
    for i, (w, b) in enumerate(params):
        z = jnp.dot(h, w.astype(jnp.bfloat16),
                    preferred_element_type=jnp.float32) + b.reshape(1, -1)
        if i < len(params) - 1:
            h = jnp.maximum(z, 0.0).astype(jnp.bfloat16)
    return jax.nn.softmax(z, axis=1)


if __name__ == "__main__":
    key = jax.random.PRNGKey(0)
    nodes = [32, 64, 64, 64, 64]   # [input_dim, h1, h2, h3, h4]
    n_classes = 16
    batch = 8

    key, kx = jax.random.split(key)
    x = jax.random.normal(kx, (batch, nodes[0]), jnp.float32)
    params = init_params(key, nodes, n_classes)

    out = mlp_forward(x, params)
    out = jax.block_until_ready(out)

    ref_bf16 = mlp_reference_bf16(x, params)   # same-precision reference (tight)
    ref_f32 = mlp_reference_f32(x, params)     # original f32 semantics (loose, bf16 drift)

    assert out.shape == (batch, n_classes)
    assert jnp.allclose(out, ref_bf16, atol=5e-3), "mismatch vs. bf16-mirrored reference"
    assert jnp.allclose(out, ref_f32, atol=3e-2), "mismatch vs. f32 reference"
    assert jnp.allclose(jnp.sum(out, axis=1), 1.0, atol=5e-3), "softmax rows must sum to ~1"
    assert jnp.all(jnp.argmax(out, axis=1) == jnp.argmax(ref_f32, axis=1)), "argmax mismatch"

    print("KERNEL_OK")
</pallas_src>

<mosaic_0001>
module attributes {stable_mosaic.version = 11 : i64} {
  func.func @mlp_kernel(%arg0: i32, %arg1: memref<8x128xbf16, #tpu.memory_space<vmem>>, %arg2: memref<5x128x128xbf16, #tpu.memory_space<vmem>>, %arg3: memref<5x1x128xf32, #tpu.memory_space<vmem>>, %arg4: memref<8x128xf32, #tpu.memory_space<vmem>>) attributes {dimension_semantics = [#tpu.dimension_semantics<parallel>], iteration_bounds = array<i64: 1>, scalar_prefetch = 0 : i64, scratch_operands = 0 : i64, tpu.core_type = #tpu.core_type<tc>, window_params = [{transform_indices = @transform_0, window_bounds = array<i64: 8, 128>}, {pipeline_mode = #tpu.pipeline_mode<synchronous>, transform_indices = @transform_1, window_bounds = array<i64: 5, 128, 128>}, {pipeline_mode = #tpu.pipeline_mode<synchronous>, transform_indices = @transform_2, window_bounds = array<i64: 5, 1, 128>}, {transform_indices = @transform_3, window_bounds = array<i64: 8, 128>}]} {
    %c0 = arith.constant 0 : index
    %c0_0 = arith.constant 0 : index
    %0 = vector.load %arg1[%c0, %c0_0] : memref<8x128xbf16, #tpu.memory_space<vmem>>, vector<8x128xbf16>
    %c0_1 = arith.constant 0 : index
    %c0_2 = arith.constant 0 : index
    %c0_3 = arith.constant 0 : index
    %1 = vector.load %arg2[%c0_1, %c0_2, %c0_3] : memref<5x128x128xbf16, #tpu.memory_space<vmem>>, vector<1x128x128xbf16>
    %2 = vector.shape_cast %1 : vector<1x128x128xbf16> to vector<128x128xbf16>
    %cst = arith.constant dense<0.000000e+00> : vector<8x128xf32>
    %3 = tpu.matmul %0, %2, %cst {dimension_numbers = #tpu.dot_dimension_numbers<[1], [0], [0], [1], [0, 0, 1, 1], [], []>} : vector<8x128xbf16>, vector<128x128xbf16>, vector<8x128xf32> -> vector<8x128xf32>
    %c0_4 = arith.constant 0 : index
    %c0_5 = arith.constant 0 : index
    %c0_6 = arith.constant 0 : index
    %4 = vector.load %arg3[%c0_4, %c0_5, %c0_6] : memref<5x1x128xf32, #tpu.memory_space<vmem>>, vector<1x1x128xf32>
    %5 = vector.shape_cast %4 : vector<1x1x128xf32> to vector<1x128xf32>
    %6 = vector.broadcast %5 : vector<1x128xf32> to vector<8x128xf32>
    %7 = arith.addf %3, %6 : vector<8x128xf32>
    %cst_7 = arith.constant 0.000000e+00 : f32
    %8 = vector.broadcast %cst_7 : f32 to vector<8x128xf32>
    %9 = arith.maximumf %7, %8 : vector<8x128xf32>
    %10 = arith.truncf %9 : vector<8x128xf32> to vector<8x128xbf16>
    %c1 = arith.constant 1 : index
    %c0_8 = arith.constant 0 : index
    %c0_9 = arith.constant 0 : index
    %11 = vector.load %arg2[%c1, %c0_8, %c0_9] : memref<5x128x128xbf16, #tpu.memory_space<vmem>>, vector<1x128x128xbf16>
    %12 = vector.shape_cast %11 : vector<1x128x128xbf16> to vector<128x128xbf16>
    %cst_10 = arith.constant dense<0.000000e+00> : vector<8x128xf32>
    %13 = tpu.matmul %10, %12, %cst_10 {dimension_numbers = #tpu.dot_dimension_numbers<[1], [0], [0], [1], [0, 0, 1, 1], [], []>} : vector<8x128xbf16>, vector<128x128xbf16>, vector<8x128xf32> -> vector<8x128xf32>
    %c1_11 = arith.constant 1 : index
    %c0_12 = arith.constant 0 : index
    %c0_13 = arith.constant 0 : index
    %14 = vector.load %arg3[%c1_11, %c0_12, %c0_13] : memref<5x1x128xf32, #tpu.memory_space<vmem>>, vector<1x1x128xf32>
    %15 = vector.shape_cast %14 : vector<1x1x128xf32> to vector<1x128xf32>
    %16 = vector.broadcast %15 : vector<1x128xf32> to vector<8x128xf32>
    %17 = arith.addf %13, %16 : vector<8x128xf32>
    %cst_14 = arith.constant 0.000000e+00 : f32
    %18 = vector.broadcast %cst_14 : f32 to vector<8x128xf32>
    %19 = arith.maximumf %17, %18 : vector<8x128xf32>
    %20 = arith.truncf %19 : vector<8x128xf32> to vector<8x128xbf16>
    %c2 = arith.constant 2 : index
    %c0_15 = arith.constant 0 : index
    %c0_16 = arith.constant 0 : index
    %21 = vector.load %arg2[%c2, %c0_15, %c0_16] : memref<5x128x128xbf16, #tpu.memory_space<vmem>>, vector<1x128x128xbf16>
    %22 = vector.shape_cast %21 : vector<1x128x128xbf16> to vector<128x128xbf16>
    %cst_17 = arith.constant dense<0.000000e+00> : vector<8x128xf32>
    %23 = tpu.matmul %20, %22, %cst_17 {dimension_numbers = #tpu.dot_dimension_numbers<[1], [0], [0], [1], [0, 0, 1, 1], [], []>} : vector<8x128xbf16>, vector<128x128xbf16>, vector<8x128xf32> -> vector<8x128xf32>
    %c2_18 = arith.constant 2 : index
    %c0_19 = arith.constant 0 : index
    %c0_20 = arith.constant 0 : index
    %24 = vector.load %arg3[%c2_18, %c0_19, %c0_20] : memref<5x1x128xf32, #tpu.memory_space<vmem>>, vector<1x1x128xf32>
    %25 = vector.shape_cast %24 : vector<1x1x128xf32> to vector<1x128xf32>
    %26 = vector.broadcast %25 : vector<1x128xf32> to vector<8x128xf32>
    %27 = arith.addf %23, %26 : vector<8x128xf32>
    %cst_21 = arith.constant 0.000000e+00 : f32
    %28 = vector.broadcast %cst_21 : f32 to vector<8x128xf32>
    %29 = arith.maximumf %27, %28 : vector<8x128xf32>
    %30 = arith.truncf %29 : vector<8x128xf32> to vector<8x128xbf16>
    %c3 = arith.constant 3 : index
    %c0_22 = arith.constant 0 : index
    %c0_23 = arith.constant 0 : index
    %31 = vector.load %arg2[%c3, %c0_22, %c0_23] : memref<5x128x128xbf16, #tpu.memory_space<vmem>>, vector<1x128x128xbf16>
    %32 = vector.shape_cast %31 : vector<1x128x128xbf16> to vector<128x128xbf16>
    %cst_24 = arith.constant dense<0.000000e+00> : vector<8x128xf32>
    %33 = tpu.matmul %30, %32, %cst_24 {dimension_numbers = #tpu.dot_dimension_numbers<[1], [0], [0], [1], [0, 0, 1, 1], [], []>} : vector<8x128xbf16>, vector<128x128xbf16>, vector<8x128xf32> -> vector<8x128xf32>
    %c3_25 = arith.constant 3 : index
    %c0_26 = arith.constant 0 : index
    %c0_27 = arith.constant 0 : index
    %34 = vector.load %arg3[%c3_25, %c0_26, %c0_27] : memref<5x1x128xf32, #tpu.memory_space<vmem>>, vector<1x1x128xf32>
    %35 = vector.shape_cast %34 : vector<1x1x128xf32> to vector<1x128xf32>
    %36 = vector.broadcast %35 : vector<1x128xf32> to vector<8x128xf32>
    %37 = arith.addf %33, %36 : vector<8x128xf32>
    %cst_28 = arith.constant 0.000000e+00 : f32
    %38 = vector.broadcast %cst_28 : f32 to vector<8x128xf32>
    %39 = arith.maximumf %37, %38 : vector<8x128xf32>
    %40 = arith.truncf %39 : vector<8x128xf32> to vector<8x128xbf16>
    %c4 = arith.constant 4 : index
    %c0_29 = arith.constant 0 : index
    %c0_30 = arith.constant 0 : index
    %41 = vector.load %arg2[%c4, %c0_29, %c0_30] : memref<5x128x128xbf16, #tpu.memory_space<vmem>>, vector<1x128x128xbf16>
    %42 = vector.shape_cast %41 : vector<1x128x128xbf16> to vector<128x128xbf16>
    %cst_31 = arith.constant dense<0.000000e+00> : vector<8x128xf32>
    %43 = tpu.matmul %40, %42, %cst_31 {dimension_numbers = #tpu.dot_dimension_numbers<[1], [0], [0], [1], [0, 0, 1, 1], [], []>} : vector<8x128xbf16>, vector<128x128xbf16>, vector<8x128xf32> -> vector<8x128xf32>
    %c4_32 = arith.constant 4 : index
    %c0_33 = arith.constant 0 : index
    %c0_34 = arith.constant 0 : index
    %44 = vector.load %arg3[%c4_32, %c0_33, %c0_34] : memref<5x1x128xf32, #tpu.memory_space<vmem>>, vector<1x1x128xf32>
    %45 = vector.shape_cast %44 : vector<1x1x128xf32> to vector<1x128xf32>
    %46 = vector.broadcast %45 : vector<1x128xf32> to vector<8x128xf32>
    %47 = arith.addf %43, %46 : vector<8x128xf32>
    %cst_35 = arith.constant dense<0xFF800000> : vector<8xf32>
    %48 = vector.multi_reduction <maximumf>, %47, %cst_35 [1] : vector<8x128xf32> to vector<8xf32>
    %49 = vector.shape_cast %48 : vector<8xf32> to vector<8x1xf32>
    %50 = vector.broadcast %49 : vector<8x1xf32> to vector<8x128xf32>
    %51 = arith.subf %47, %50 : vector<8x128xf32>
    %52 = math.exp %51 : vector<8x128xf32>
    %cst_36 = arith.constant dense<0.000000e+00> : vector<8xf32>
    %53 = vector.multi_reduction <add>, %52, %cst_36 [1] : vector<8x128xf32> to vector<8xf32>
    %54 = vector.shape_cast %53 : vector<8xf32> to vector<8x1xf32>
    %55 = tpu.reciprocal %54 {approx = true} : vector<8x1xf32> -> vector<8x1xf32>
    %56 = vector.broadcast %55 : vector<8x1xf32> to vector<8x128xf32>
    %57 = arith.mulf %52, %56 : vector<8x128xf32>
    %c0_37 = arith.constant 0 : index
    %c0_38 = arith.constant 0 : index
    %58 = vector.load %arg4[%c0_37, %c0_38] : memref<8x128xf32, #tpu.memory_space<vmem>>, vector<8x128xf32>
    tpu.vector_store %arg4[%c0_37, %c0_38], %57 {strides = array<i32>} : memref<8x128xf32, #tpu.memory_space<vmem>>, vector<8x128xf32>,
    return
  }
  func.func @transform_0(%arg0: i32) -> (i32, i32) {
    %c0_i32 = arith.constant 0 : i32
    %c0_i32_0 = arith.constant 0 : i32
    return %arg0, %c0_i32 : i32, i32
  }
  func.func @transform_1(%arg0: i32) -> (i32, i32, i32) {
    %c0_i32 = arith.constant 0 : i32
    %c0_i32_0 = arith.constant 0 : i32
    %c0_i32_1 = arith.constant 0 : i32
    %c0_i32_2 = arith.constant 0 : i32
    return %c0_i32, %c0_i32_0, %c0_i32_1 : i32, i32, i32
  }
  func.func @transform_2(%arg0: i32) -> (i32, i32, i32) {
    %c0_i32 = arith.constant 0 : i32
    %c0_i32_0 = arith.constant 0 : i32
    %c0_i32_1 = arith.constant 0 : i32
    %c0_i32_2 = arith.constant 0 : i32
    return %c0_i32, %c0_i32_0, %c0_i32_1 : i32, i32, i32
  }
  func.func @transform_3(%arg0: i32) -> (i32, i32) {
    %c0_i32 = arith.constant 0 : i32
    %c0_i32_0 = arith.constant 0 : i32
    return %arg0, %c0_i32 : i32, i32
  }
}

</mosaic_0001>

<llo_original>
// kernel: tpu_custom_call.1
$region0: #{tpu_custom_call.1}
  #allocation0 [shape = 'u32[]', space=smem, size = 0x4, offset = 0x4, fixed_abs, tag = 'smem constant byte address 0x4 - core index']
  #allocation1 [shape = 'u32[144,128]{1,0:T(1,128)}', space=vmem, size = 0x12000, scoped, tag = 'internal scratch']
  %s0 = inlined_call_operand.hbm [shape: bf16[8,128], index: 0, kind: input, shape index: {}]
  %s1 = inlined_call_operand.hbm [shape: bf16[5,128,128], index: 1, kind: input, shape index: {}]
  %s2 = inlined_call_operand.vmem [shape: f32[5,1,128], index: 2, kind: input, shape index: {}]
  %s3 = inlined_call_operand.hbm [shape: f32[8,128], index: 3, kind: output, shape index: {}]
  %s4 = sld [smem:[#allocation0]]
  $region30: #{tpu_custom_call.1} parent=0
    _
  %s6 = ssub.s32 1, %s4
  %s7 = scalar_select 0, %s6, %s4
  $region1: #{tpu_custom_call.1} parent=0
    #allocation2 [shape = 'u8[2048]{0}', space=vmem, size = 0x800, scoped, tag = 'input window, operand 0, single buffered']
    #allocation3 [shape = 's32[1]{0}', space=sflag, size = 0x4, scoped, tag = 'scoped memory for tpu_custom_call.1']
    #allocation4 [shape = 's32[1]{0}', space=sflag, size = 0x4, scoped, tag = 'scoped memory for tpu_custom_call.1']
    #allocation5 [shape = 'u8[163840]{0}', space=vmem, size = 0x28000, scoped, tag = 'input window, operand 1, single buffered']
    #allocation6 [shape = 's32[1]{0}', space=sflag, size = 0x4, scoped, tag = 'scoped memory for tpu_custom_call.1']
    #allocation7 [shape = 'u8[4096]{0}', space=vmem, size = 0x1000, scoped, tag = 'output window, operand 0, single buffered']
    %8 = vsyncpa [#allocation3], 0
    %9 = vsyncpa [#allocation6], 0
    %10 = vsyncpa [#allocation4], 0
    // Predicated region
    $region2: #{tpu_custom_call.1} parent=1 // pred_check
      _
    $region3: #{tpu_custom_call.1} parent=1 // pred_check_branch
      %12 = sbr.rel (0) target = $region5
    $region4: #{tpu_custom_call.1} parent=1 // pred_region
      %s14 = ssub.s32 64, 64
      %15 = vsyncadd [#allocation3], %s14
      %s17 = sshll.u32 [#allocation2], 4
      %s18 = int_to_ptr.vmem [resolvable:$true] %s17
      %20 = dma.hbm_to_vmem [thread:$0]  %s0, 64, %s18, [#allocation3]
    $region5: #{tpu_custom_call.1} parent=1 // pred_fallthru
      _
    // Predicated region
    $region6: #{tpu_custom_call.1} parent=1 // pred_check
      _
    $region7: #{tpu_custom_call.1} parent=1 // pred_check_branch
      %22 = sbr.rel (0) target = $region9
    $region8: #{tpu_custom_call.1} parent=1 // pred_region
      %s24 = ssub.s32 5120, 5120
      %25 = vsyncadd [#allocation6], %s24
      %s26 = sshll.u32 [#allocation5], 4
      %s27 = int_to_ptr.vmem [resolvable:$true] %s26
      %32 = dma.hbm_to_vmem [thread:$0]  %s1, 5120, %s27, [#allocation6], 64, 64, 4
    $region9: #{tpu_custom_call.1} parent=1 // pred_fallthru
      _
    // Predicated region
    $region10: #{tpu_custom_call.1} parent=1 // pred_check
      _
    $region11: #{tpu_custom_call.1} parent=1 // pred_check_branch
      %34 = sbr.rel (0) target = $region13
    $region12: #{tpu_custom_call.1} parent=1 // pred_region
      _
    $region13: #{tpu_custom_call.1} parent=1 // pred_fallthru
      _
    // Predicated region
    $region14: #{tpu_custom_call.1} parent=1 // pred_check
      _
    $region15: #{tpu_custom_call.1} parent=1 // pred_check_branch
      %36 = sbr.rel (0) target = $region17
    $region16: #{tpu_custom_call.1} parent=1 // pred_region
      %37 = dma.done [#allocation3], 64
    $region17: #{tpu_custom_call.1} parent=1 // pred_fallthru
      _
    // Predicated region
    $region18: #{tpu_custom_call.1} parent=1 // pred_check
      _
    $region19: #{tpu_custom_call.1} parent=1 // pred_check_branch
      %39 = sbr.rel (0) target = $region21
    $region20: #{tpu_custom_call.1} parent=1 // pred_region
      %40 = dma.done [#allocation6], 5120
    $region21: #{tpu_custom_call.1} parent=1 // pred_fallthru
      _
    %v42 = vld [vmem:[#allocation2] sm:$0xf]
    %v43 = vld [vmem:[#allocation5] sm:$0xf]
    %v44 = vld [vmem:[#allocation5 + $0x4] sm:$0xf]
    %v45 = vld [vmem:[#allocation5 + $0x8] sm:$0xf]
    %v46 = vld [vmem:[#allocation5 + $0xc] sm:$0xf]
    %v47 = vld [vmem:[#allocation5 + $0x10] sm:$0xf]
    %v48 = vld [vmem:[#allocation5 + $0x14] sm:$0xf]
    %v49 = vld [vmem:[#allocation5 + $0x18] sm:$0xf]
    %v50 = vld [vmem:[#allocation5 + $0x1c] sm:$0xf]
    %v51 = vld [vmem:[#allocation5 + $0x20] sm:$0xf]
    %v52 = vld [vmem:[#allocation5 + $0x24] sm:$0xf]
    %v53 = vld [vmem:[#allocation5 + $0x28] sm:$0xf]
    %v54 = vld [vmem:[#allocation5 + $0x2c] sm:$0xf]
    %v55 = vld [vmem:[#allocation5 + $0x30] sm:$0xf]
    %v56 = vld [vmem:[#allocation5 + $0x34] sm:$0xf]
    %v57 = vld [vmem:[#allocation5 + $0x38] sm:$0xf]
    %v58 = vld [vmem:[#allocation5 + $0x3c] sm:$0xf]
    %v59 = vld [vmem:[%s2] sm:$0x1]
    %v61 = vlaneseq
    %v62 = vshrl.u32 %v61, 7
    %v63 = vsub.s32 0, %v62
    %v64 = vrot.slane %v59, %v63
    %v82 = vunpack.c.l.b16 %v43
    %v83 = vunpack.c.l.b16 %v44
    %v84 = vunpack.c.l.b16 %v45
    %v85 = vunpack.c.l.b16 %v46
    %v86 = vunpack.c.l.b16 %v47
    %v87 = vunpack.c.l.b16 %v48
    %v88 = vunpack.c.l.b16 %v49
    %v89 = vunpack.c.l.b16 %v50
    %v90 = vunpack.c.l.b16 %v51
    %v91 = vunpack.c.l.b16 %v52
    %v92 = vunpack.c.l.b16 %v53
    %v93 = vunpack.c.l.b16 %v54
    %v94 = vunpack.c.l.b16 %v55
    %v95 = vunpack.c.l.b16 %v56
    %v96 = vunpack.c.l.b16 %v57
    %v97 = vunpack.c.l.b16 %v58
    %v98 = vpack.c.b16 %v83, %v82
    %v99 = vpack.c.b16 %v85, %v84
    %v100 = vpack.c.b16 %v87, %v86
    %v101 = vpack.c.b16 %v89, %v88
    %v102 = vpack.c.b16 %v91, %v90
    %v103 = vpack.c.b16 %v93, %v92
    %v104 = vpack.c.b16 %v95, %v94
    %v105 = vpack.c.b16 %v97, %v96
    %114 = vmatprep.subr.bf16.mxu0 0
    %115 = vmatpush1.bf16.msra.mxu0 %v98
    %116 = vmatprep.subr.bf16.mxu0 0
    %117 = vmatpush1.bf16.msra.mxu0 %v99
    %118 = vmatprep.subr.bf16.mxu0 0
    %119 = vmatpush1.bf16.msra.mxu0 %v100
    %120 = vmatprep.subr.bf16.mxu0 0
    %121 = vmatpush1.bf16.msra.mxu0 %v101
    %122 = vmatprep.subr.bf16.mxu0 0
    %123 = vmatpush1.bf16.msra.mxu0 %v102
    %124 = vmatprep.subr.bf16.mxu0 0
    %125 = vmatpush1.bf16.msra.mxu0 %v103
    %126 = vmatprep.subr.bf16.mxu0 0
    %127 = vmatpush1.bf16.msra.mxu0 %v104
    %128 = vmatprep.subr.bf16.mxu0 0
    %129 = vmatpush1.bf16.msra.mxu0 %v105
    %130 = vmatprep.subr.bf16.mxu0 0
    %131 = vmatpush1.bf16.msra.mxu0 0
    %132 = vmatprep.subr.bf16.mxu0 0
    %133 = vmatpush1.bf16.msra.mxu0 0
    %134 = vmatprep.subr.bf16.mxu0 0
    %135 = vmatpush1.bf16.msra.mxu0 0
    %136 = vmatprep.subr.bf16.mxu0 0
    %137 = vmatpush1.bf16.msra.mxu0 0
    %138 = vmatprep.subr.bf16.mxu0 0
    %139 = vmatpush1.bf16.msra.mxu0 0
    %140 = vmatprep.subr.bf16.mxu0 0
    %141 = vmatpush1.bf16.msra.mxu0 0
    %142 = vmatprep.subr.bf16.mxu0 0
    %143 = vmatpush1.bf16.msra.mxu0 0
    %144 = vmatprep.subr.bf16.mxu0 0
    %145 = vmatpush1.bf16.msra.mxu0 0
    %146 = vmatprep.mubr.bf16.mxu0 0
    %147 = vmatmul.mubr.bf16.gmra.mrb[0].mxu0 %v42
    %v148 = vpop.f32.mrb[0].mxu0
    %v149 = vadd.f32 %v64, %v148
    %v150 = vpop.f32.mrb[0].mxu0
    %v151 = vpop.f32.mrb[0].mxu0
    %v152 = vpop.f32.mrb[0].mxu0
    %153 = vdwg.mxu0
    %v154 = vmax.f32 %v149, 0.0
    %v155 = vpack.c.bf16 %v154, %v154
    %s156 = scalar_lea.vmem [#allocation5], 64
    %v157 = vld [vmem:[%s156] sm:$0xf]
    %v158 = vld [vmem:[%s156 + $0x4] sm:$0xf]
    %v159 = vld [vmem:[%s156 + $0x8] sm:$0xf]
    %v160 = vld [vmem:[%s156 + $0xc] sm:$0xf]
    %v161 = vld [vmem:[%s156 + $0x10] sm:$0xf]
    %v162 = vld [vmem:[%s156 + $0x14] sm:$0xf]
    %v163 = vld [vmem:[%s156 + $0x18] sm:$0xf]
    %v164 = vld [vmem:[%s156 + $0x1c] sm:$0xf]
    %v165 = vld [vmem:[%s156 + $0x20] sm:$0xf]
    %v166 = vld [vmem:[%s156 + $0x24] sm:$0xf]
    %v167 = vld [vmem:[%s156 + $0x28] sm:$0xf]
    %v168 = vld [vmem:[%s156 + $0x2c] sm:$0xf]
    %v169 = vld [vmem:[%s156 + $0x30] sm:$0xf]
    %v170 = vld [vmem:[%s156 + $0x34] sm:$0xf]
    %v171 = vld [vmem:[%s156 + $0x38] sm:$0xf]
    %v172 = vld [vmem:[%s156 + $0x3c] sm:$0xf]
    %s173 = scalar_lea.vmem %s2, 1
    %v174 = vld [vmem:[%s173] sm:$0x1]
    %v176 = vlaneseq
    %v177 = vshrl.u32 %v176, 7
    %v178 = vsub.s32 0, %v177
    %v179 = vrot.slane %v174, %v178
    %v197 = vunpack.c.l.b16 %v157
    %v198 = vunpack.c.l.b16 %v158
    %v199 = vunpack.c.l.b16 %v159
    %v200 = vunpack.c.l.b16 %v160
    %v201 = vunpack.c.l.b16 %v161
    %v202 = vunpack.c.l.b16 %v162
    %v203 = vunpack.c.l.b16 %v163
    %v204 = vunpack.c.l.b16 %v164
    %v205 = vunpack.c.l.b16 %v165
    %v206 = vunpack.c.l.b16 %v166
    %v207 = vunpack.c.l.b16 %v167
    %v208 = vunpack.c.l.b16 %v168
    %v209 = vunpack.c.l.b16 %v169
    %v210 = vunpack.c.l.b16 %v170
    %v211 = vunpack.c.l.b16 %v171
    %v212 = vunpack.c.l.b16 %v172
    %v213 = vpack.c.b16 %v198, %v197
    %v214 = vpack.c.b16 %v200, %v199
    %v215 = vpack.c.b16 %v202, %v201
    %v216 = vpack.c.b16 %v204, %v203
    %v217 = vpack.c.b16 %v206, %v205
    %v218 = vpack.c.b16 %v208, %v207
    %v219 = vpack.c.b16 %v210, %v209
    %v220 = vpack.c.b16 %v212, %v211
    %229 = vmatprep.subr.bf16.mxu0 0
    %230 = vmatpush1.bf16.msra.mxu0 %v213
    %231 = vmatprep.subr.bf16.mxu0 0
    %232 = vmatpush1.bf16.msra.mxu0 %v214
    %233 = vmatprep.subr.bf16.mxu0 0
    %234 = vmatpush1.bf16.msra.mxu0 %v215
    %235 = vmatprep.subr.bf16.mxu0 0
    %236 = vmatpush1.bf16.msra.mxu0 %v216
    %237 = vmatprep.subr.bf16.mxu0 0
    %238 = vmatpush1.bf16.msra.mxu0 %v217
    %239 = vmatprep.subr.bf16.mxu0 0
    %240 = vmatpush1.bf16.msra.mxu0 %v218
    %241 = vmatprep.subr.bf16.mxu0 0
    %242 = vmatpush1.bf16.msra.mxu0 %v219
    %243 = vmatprep.subr.bf16.mxu0 0
    %244 = vmatpush1.bf16.msra.mxu0 %v220
    %245 = vmatprep.subr.bf16.mxu0 0
    %246 = vmatpush1.bf16.msra.mxu0 0
    %247 = vmatprep.subr.bf16.mxu0 0
    %248 = vmatpush1.bf16.msra.mxu0 0
    %249 = vmatprep.subr.bf16.mxu0 0
    %250 = vmatpush1.bf16.msra.mxu0 0
    %251 = vmatprep.subr.bf16.mxu0 0
    %252 = vmatpush1.bf16.msra.mxu0 0
    %253 = vmatprep.subr.bf16.mxu0 0
    %254 = vmatpush1.bf16.msra.mxu0 0
    %255 = vmatprep.subr.bf16.mxu0 0
    %256 = vmatpush1.bf16.msra.mxu0 0
    %257 = vmatprep.subr.bf16.mxu0 0
    %258 = vmatpush1.bf16.msra.mxu0 0
    %259 = vmatprep.subr.bf16.mxu0 0
    %260 = vmatpush1.bf16.msra.mxu0 0
    %261 = vmatprep.mubr.bf16.mxu0 0
    %262 = vmatmul.mubr.bf16.gmra.mrb[0].mxu0 %v155
    %v263 = vpop.f32.mrb[0].mxu0
    %v264 = vadd.f32 %v179, %v263
    %v265 = vpop.f32.mrb[0].mxu0
    %v266 = vpop.f32.mrb[0].mxu0
    %v267 = vpop.f32.mrb[0].mxu0
    %268 = vdwg.mxu0
    %v269 = vmax.f32 %v264, 0.0
    %v270 = vpack.c.bf16 %v269, %v269
    %s271 = scalar_lea.vmem [#allocation5], 128
    %v272 = vld [vmem:[%s271] sm:$0xf]
    %v273 = vld [vmem:[%s271 + $0x4] sm:$0xf]
    %v274 = vld [vmem:[%s271 + $0x8] sm:$0xf]
    %v275 = vld [vmem:[%s271 + $0xc] sm:$0xf]
    %v276 = vld [vmem:[%s271 + $0x10] sm:$0xf]
    %v277 = vld [vmem:[%s271 + $0x14] sm:$0xf]
    %v278 = vld [vmem:[%s271 + $0x18] sm:$0xf]
    %v279 = vld [vmem:[%s271 + $0x1c] sm:$0xf]
    %v280 = vld [vmem:[%s271 + $0x20] sm:$0xf]
    %v281 = vld [vmem:[%s271 + $0x24] sm:$0xf]
    %v282 = vld [vmem:[%s271 + $0x28] sm:$0xf]
    %v283 = vld [vmem:[%s271 + $0x2c] sm:$0xf]
    %v284 = vld [vmem:[%s271 + $0x30] sm:$0xf]
    %v285 = vld [vmem:[%s271 + $0x34] sm:$0xf]
    %v286 = vld [vmem:[%s271 + $0x38] sm:$0xf]
    %v287 = vld [vmem:[%s271 + $0x3c] sm:$0xf]
    %s288 = scalar_lea.vmem %s2, 2
    %v289 = vld [vmem:[%s288] sm:$0x1]
    %v291 = vlaneseq
    %v292 = vshrl.u32 %v291, 7
    %v293 = vsub.s32 0, %v292
    %v294 = vrot.slane %v289, %v293
    %v312 = vunpack.c.l.b16 %v272
    %v313 = vunpack.c.l.b16 %v273
    %v314 = vunpack.c.l.b16 %v274
    %v315 = vunpack.c.l.b16 %v275
    %v316 = vunpack.c.l.b16 %v276
    %v317 = vunpack.c.l.b16 %v277
    %v318 = vunpack.c.l.b16 %v278
    %v319 = vunpack.c.l.b16 %v279
    %v320 = vunpack.c.l.b16 %v280
    %v321 = vunpack.c.l.b16 %v281
    %v322 = vunpack.c.l.b16 %v282
    %v323 = vunpack.c.l.b16 %v283
    %v324 = vunpack.c.l.b16 %v284
    %v325 = vunpack.c.l.b16 %v285
    %v326 = vunpack.c.l.b16 %v286
    %v327 = vunpack.c.l.b16 %v287
    %v328 = vpack.c.b16 %v313, %v312
    %v329 = vpack.c.b16 %v315, %v314
    %v330 = vpack.c.b16 %v317, %v316
    %v331 = vpack.c.b16 %v319, %v318
    %v332 = vpack.c.b16 %v321, %v320
    %v333 = vpack.c.b16 %v323, %v322
    %v334 = vpack.c.b16 %v325, %v324
    %v335 = vpack.c.b16 %v327, %v326
    %344 = vmatprep.subr.bf16.mxu0 0
    %345 = vmatpush1.bf16.msra.mxu0 %v328
    %346 = vmatprep.subr.bf16.mxu0 0
    %347 = vmatpush1.bf16.msra.mxu0 %v329
    %348 = vmatprep.subr.bf16.mxu0 0
    %349 = vmatpush1.bf16.msra.mxu0 %v330
    %350 = vmatprep.subr.bf16.mxu0 0
    %351 = vmatpush1.bf16.msra.mxu0 %v331
    %352 = vmatprep.subr.bf16.mxu0 0
    %353 = vmatpush1.bf16.msra.mxu0 %v332
    %354 = vmatprep.subr.bf16.mxu0 0
    %355 = vmatpush1.bf16.msra.mxu0 %v333
    %356 = vmatprep.subr.bf16.mxu0 0
    %357 = vmatpush1.bf16.msra.mxu0 %v334
    %358 = vmatprep.subr.bf16.mxu0 0
    %359 = vmatpush1.bf16.msra.mxu0 %v335
    %360 = vmatprep.subr.bf16.mxu0 0
    %361 = vmatpush1.bf16.msra.mxu0 0
    %362 = vmatprep.subr.bf16.mxu0 0
    %363 = vmatpush1.bf16.msra.mxu0 0
    %364 = vmatprep.subr.bf16.mxu0 0
    %365 = vmatpush1.bf16.msra.mxu0 0
    %366 = vmatprep.subr.bf16.mxu0 0
    %367 = vmatpush1.bf16.msra.mxu0 0
    %368 = vmatprep.subr.bf16.mxu0 0
    %369 = vmatpush1.bf16.msra.mxu0 0
    %370 = vmatprep.subr.bf16.mxu0 0
    %371 = vmatpush1.bf16.msra.mxu0 0
    %372 = vmatprep.subr.bf16.mxu0 0
    %373 = vmatpush1.bf16.msra.mxu0 0
    %374 = vmatprep.subr.bf16.mxu0 0
    %375 = vmatpush1.bf16.msra.mxu0 0
    %376 = vmatprep.mubr.bf16.mxu0 0
    %377 = vmatmul.mubr.bf16.gmra.mrb[0].mxu0 %v270
    %v378 = vpop.f32.mrb[0].mxu0
    %v379 = vadd.f32 %v294, %v378
    %v380 = vpop.f32.mrb[0].mxu0
    %v381 = vpop.f32.mrb[0].mxu0
    %v382 = vpop.f32.mrb[0].mxu0
    %383 = vdwg.mxu0
    %v384 = vmax.f32 %v379, 0.0
    %v385 = vpack.c.bf16 %v384, %v384
    %s386 = scalar_lea.vmem [#allocation5], 192
    %v387 = vld [vmem:[%s386] sm:$0xf]
    %v388 = vld [vmem:[%s386 + $0x4] sm:$0xf]
    %v389 = vld [vmem:[%s386 + $0x8] sm:$0xf]
    %v390 = vld [vmem:[%s386 + $0xc] sm:$0xf]
    %v391 = vld [vmem:[%s386 + $0x10] sm:$0xf]
    %v392 = vld [vmem:[%s386 + $0x14] sm:$0xf]
    %v393 = vld [vmem:[%s386 + $0x18] sm:$0xf]
    %v394 = vld [vmem:[%s386 + $0x1c] sm:$0xf]
    %v395 = vld [vmem:[%s386 + $0x20] sm:$0xf]
    %v396 = vld [vmem:[%s386 + $0x24] sm:$0xf]
    %v397 = vld [vmem:[%s386 + $0x28] sm:$0xf]
    %v398 = vld [vmem:[%s386 + $0x2c] sm:$0xf]
    %v399 = vld [vmem:[%s386 + $0x30] sm:$0xf]
    %v400 = vld [vmem:[%s386 + $0x34] sm:$0xf]
    %v401 = vld [vmem:[%s386 + $0x38] sm:$0xf]
    %v402 = vld [vmem:[%s386 + $0x3c] sm:$0xf]
    %s403 = scalar_lea.vmem %s2, 3
    %v404 = vld [vmem:[%s403] sm:$0x1]
    %v406 = vlaneseq
    %v407 = vshrl.u32 %v406, 7
    %v408 = vsub.s32 0, %v407
    %v409 = vrot.slane %v404, %v408
    %v427 = vunpack.c.l.b16 %v387
    %v428 = vunpack.c.l.b16 %v388
    %v429 = vunpack.c.l.b16 %v389
    %v430 = vunpack.c.l.b16 %v390
    %v431 = vunpack.c.l.b16 %v391
    %v432 = vunpack.c.l.b16 %v392
    %v433 = vunpack.c.l.b16 %v393
    %v434 = vunpack.c.l.b16 %v394
    %v435 = vunpack.c.l.b16 %v395
    %v436 = vunpack.c.l.b16 %v396
    %v437 = vunpack.c.l.b16 %v397
    %v438 = vunpack.c.l.b16 %v398
    %v439 = vunpack.c.l.b16 %v399
    %v440 = vunpack.c.l.b16 %v400
    %v441 = vunpack.c.l.b16 %v401
    %v442 = vunpack.c.l.b16 %v402
    %v443 = vpack.c.b16 %v428, %v427
    %v444 = vpack.c.b16 %v430, %v429
    %v445 = vpack.c.b16 %v432, %v431
    %v446 = vpack.c.b16 %v434, %v433
    %v447 = vpack.c.b16 %v436, %v435
    %v448 = vpack.c.b16 %v438, %v437
    %v449 = vpack.c.b16 %v440, %v439
    %v450 = vpack.c.b16 %v442, %v441
    %459 = vmatprep.subr.bf16.mxu0 0
    %460 = vmatpush1.bf16.msra.mxu0 %v443
    %461 = vmatprep.subr.bf16.mxu0 0
    %462 = vmatpush1.bf16.msra.mxu0 %v444
    %463 = vmatprep.subr.bf16.mxu0 0
    %464 = vmatpush1.bf16.msra.mxu0 %v445
    %465 = vmatprep.subr.bf16.mxu0 0
    %466 = vmatpush1.bf16.msra.mxu0 %v446
    %467 = vmatprep.subr.bf16.mxu0 0
    %468 = vmatpush1.bf16.msra.mxu0 %v447
    %469 = vmatprep.subr.bf16.mxu0 0
    %470 = vmatpush1.bf16.msra.mxu0 %v448
    %471 = vmatprep.subr.bf16.mxu0 0
    %472 = vmatpush1.bf16.msra.mxu0 %v449
    %473 = vmatprep.subr.bf16.mxu0 0
    %474 = vmatpush1.bf16.msra.mxu0 %v450
    %475 = vmatprep.subr.bf16.mxu0 0
    %476 = vmatpush1.bf16.msra.mxu0 0
    %477 = vmatprep.subr.bf16.mxu0 0
    %478 = vmatpush1.bf16.msra.mxu0 0
    %479 = vmatprep.subr.bf16.mxu0 0
    %480 = vmatpush1.bf16.msra.mxu0 0
    %481 = vmatprep.subr.bf16.mxu0 0
    %482 = vmatpush1.bf16.msra.mxu0 0
    %483 = vmatprep.subr.bf16.mxu0 0
    %484 = vmatpush1.bf16.msra.mxu0 0
    %485 = vmatprep.subr.bf16.mxu0 0
    %486 = vmatpush1.bf16.msra.mxu0 0
    %487 = vmatprep.subr.bf16.mxu0 0
    %488 = vmatpush1.bf16.msra.mxu0 0
    %489 = vmatprep.subr.bf16.mxu0 0
    %490 = vmatpush1.bf16.msra.mxu0 0
    %491 = vmatprep.mubr.bf16.mxu0 0
    %492 = vmatmul.mubr.bf16.gmra.mrb[0].mxu0 %v385
    %v493 = vpop.f32.mrb[0].mxu0
    %v494 = vadd.f32 %v409, %v493
    %v495 = vpop.f32.mrb[0].mxu0
    %v496 = vpop.f32.mrb[0].mxu0
    %v497 = vpop.f32.mrb[0].mxu0
    %498 = vdwg.mxu0
    %v499 = vmax.f32 %v494, 0.0
    %v500 = vpack.c.bf16 %v499, %v499
    %s501 = scalar_lea.vmem [#allocation5], 256
    %v502 = vld [vmem:[%s501] sm:$0xf]
    %v503 = vld [vmem:[%s501 + $0x4] sm:$0xf]
    %v504 = vld [vmem:[%s501 + $0x8] sm:$0xf]
    %v505 = vld [vmem:[%s501 + $0xc] sm:$0xf]
    %v506 = vld [vmem:[%s501 + $0x10] sm:$0xf]
    %v507 = vld [vmem:[%s501 + $0x14] sm:$0xf]
    %v508 = vld [vmem:[%s501 + $0x18] sm:$0xf]
    %v509 = vld [vmem:[%s501 + $0x1c] sm:$0xf]
    %v510 = vld [vmem:[%s501 + $0x20] sm:$0xf]
    %v511 = vld [vmem:[%s501 + $0x24] sm:$0xf]
    %v512 = vld [vmem:[%s501 + $0x28] sm:$0xf]
    %v513 = vld [vmem:[%s501 + $0x2c] sm:$0xf]
    %v514 = vld [vmem:[%s501 + $0x30] sm:$0xf]
    %v515 = vld [vmem:[%s501 + $0x34] sm:$0xf]
    %v516 = vld [vmem:[%s501 + $0x38] sm:$0xf]
    %v517 = vld [vmem:[%s501 + $0x3c] sm:$0xf]
    %s518 = scalar_lea.vmem %s2, 4
    %v519 = vld [vmem:[%s518] sm:$0x1]
    %v521 = vlaneseq
    %v522 = vshrl.u32 %v521, 7
    %v523 = vsub.s32 0, %v522
    %v524 = vrot.slane %v519, %v523
    %v542 = vunpack.c.l.b16 %v502
    %v543 = vunpack.c.l.b16 %v503
    %v544 = vunpack.c.l.b16 %v504
    %v545 = vunpack.c.l.b16 %v505
    %v546 = vunpack.c.l.b16 %v506
    %v547 = vunpack.c.l.b16 %v507
    %v548 = vunpack.c.l.b16 %v508
    %v549 = vunpack.c.l.b16 %v509
    %v550 = vunpack.c.l.b16 %v510
    %v551 = vunpack.c.l.b16 %v511
    %v552 = vunpack.c.l.b16 %v512
    %v553 = vunpack.c.l.b16 %v513
    %v554 = vunpack.c.l.b16 %v514
    %v555 = vunpack.c.l.b16 %v515
    %v556 = vunpack.c.l.b16 %v516
    %v557 = vunpack.c.l.b16 %v517
    %v558 = vpack.c.b16 %v543, %v542
    %v559 = vpack.c.b16 %v545, %v544
    %v560 = vpack.c.b16 %v547, %v546
    %v561 = vpack.c.b16 %v549, %v548
    %v562 = vpack.c.b16 %v551, %v550
    %v563 = vpack.c.b16 %v553, %v552
    %v564 = vpack.c.b16 %v555, %v554
    %v565 = vpack.c.b16 %v557, %v556
    %574 = vmatprep.subr.bf16.mxu0 0
    %575 = vmatpush1.bf16.msra.mxu0 %v558
    %576 = vmatprep.subr.bf16.mxu0 0
    %577 = vmatpush1.bf16.msra.mxu0 %v559
    %578 = vmatprep.subr.bf16.mxu0 0
    %579 = vmatpush1.bf16.msra.mxu0 %v560
    %580 = vmatprep.subr.bf16.mxu0 0
    %581 = vmatpush1.bf16.msra.mxu0 %v561
    %582 = vmatprep.subr.bf16.mxu0 0
    %583 = vmatpush1.bf16.msra.mxu0 %v562
    %584 = vmatprep.subr.bf16.mxu0 0
    %585 = vmatpush1.bf16.msra.mxu0 %v563
    %586 = vmatprep.subr.bf16.mxu0 0
    %587 = vmatpush1.bf16.msra.mxu0 %v564
    %588 = vmatprep.subr.bf16.mxu0 0
    %589 = vmatpush1.bf16.msra.mxu0 %v565
    %590 = vmatprep.subr.bf16.mxu0 0
    %591 = vmatpush1.bf16.msra.mxu0 0
    %592 = vmatprep.subr.bf16.mxu0 0
    %593 = vmatpush1.bf16.msra.mxu0 0
    %594 = vmatprep.subr.bf16.mxu0 0
    %595 = vmatpush1.bf16.msra.mxu0 0
    %596 = vmatprep.subr.bf16.mxu0 0
    %597 = vmatpush1.bf16.msra.mxu0 0
    %598 = vmatprep.subr.bf16.mxu0 0
    %599 = vmatpush1.bf16.msra.mxu0 0
    %600 = vmatprep.subr.bf16.mxu0 0
    %601 = vmatpush1.bf16.msra.mxu0 0
    %602 = vmatprep.subr.bf16.mxu0 0
    %603 = vmatpush1.bf16.msra.mxu0 0
    %604 = vmatprep.subr.bf16.mxu0 0
    %605 = vmatpush1.bf16.msra.mxu0 0
    %606 = vmatprep.mubr.bf16.mxu0 0
    %607 = vmatmul.mubr.bf16.gmra.mrb[0].mxu0 %v500
    %v608 = vpop.f32.mrb[0].mxu0
    %v609 = vadd.f32 %v524, %v608
    %v610 = vpop.f32.mrb[0].mxu0
    %v611 = vpop.f32.mrb[0].mxu0
    %v612 = vpop.f32.mrb[0].mxu0
    %613 = vdwg.mxu0
    %614 = vmax.xlane.f32.xlu0 %v609
    %v615 = vpop.xlane.xlu0 %614
    %v616 = vsub.f32 %v609, %v615
    %v617 = vmul.f32 %v616, 1.442695
    %v618 = vpow.pop %v617
    %619 = vadd.xlane.f32.xlu0 %v618
    %v620 = vpop.xlane.xlu0 %619
    %v621 = vrcp.pop %v620
    %v622 = vmul.f32 %v618, %v621
    %623 = vst [vmem:[#allocation7] sm:$0xff] %v622
    // Predicated region
    $region22: #{tpu_custom_call.1} parent=1 // pred_check
      _
    $region23: #{tpu_custom_call.1} parent=1 // pred_check_branch
      %625 = sbr.rel (0) target = $region25
    $region24: #{tpu_custom_call.1} parent=1 // pred_region
      %s627 = ssub.s32 128, 128
      %628 = vsyncadd [#allocation4], %s627
      %s630 = sshll.u32 [#allocation7], 4
      %s631 = int_to_ptr.vmem [resolvable:$true] %s630
      %633 = dma.vmem_to_hbm [thread:$0]  %s631, 128, %s3, [#allocation4]
    $region25: #{tpu_custom_call.1} parent=1 // pred_fallthru
      _
    // Predicated region
    $region26: #{tpu_custom_call.1} parent=1 // pred_check
      _
    $region27: #{tpu_custom_call.1} parent=1 // pred_check_branch
      %635 = sbr.rel (0) target = $region29
    $region28: #{tpu_custom_call.1} parent=1 // pred_region
      %636 = dma.done [#allocation4], 128
    $region29: #{tpu_custom_call.1} parent=1 // pred_fallthru
      _
    %637 = vsyncpa [#allocation3], 1
    %638 = vsyncpa [#allocation6], 1
    %639 = vsyncpa [#allocation4], 1

</llo_original>
